<compile_context>
chip_gen: v6e
topology: v6e:2x2x1
jax: 0.10.0
libtpu: 0.0.40
codegen_flags: <defaults>
</compile_context>

<pallas_src>
import functools

import jax
import jax.numpy as jnp
from jax.experimental import pallas as pl
from jax.experimental.pallas import tpu as pltpu


def _round_up(x, m):
    return ((x + m - 1) // m) * m


def _vmem_capacity_bytes():
    """Physical VMEM capacity; conservative 64 MiB (v7x) fallback if unknown."""
    try:
        cap = getattr(pltpu.get_tpu_info(), "vmem_capacity_bytes", None)
        if cap:
            return int(cap)
    except Exception:
        pass
    return 64 * 1024 * 1024


def _num_tensorcores():
    """TensorCores per chip; fallback 1 (v5e/v6e behaviour: never force a split)."""
    try:
        info = pltpu.get_tpu_info()
        for name in ("num_cores", "core_count", "num_tensorcores"):
            v = getattr(info, name, None)
            if v:
                return int(v)
    except Exception:
        pass
    return 1


# ---------------------------------------------------------------------------
# Meta classifier (Linear -> ELU -> Linear on the ones vector), plain JAX.
# Perf review: a separate pallas_call for a few-hundred-FLOP MLP only adds
# launch overhead + an HBM round-trip in front of the BW-bound combine kernel.
# ---------------------------------------------------------------------------
def meta_classifier_weights(params, num_models):
    ones = jnp.ones((1, num_models), dtype=jnp.float32)
    h = ones @ params["w1_t"] + params["b1"]
    # ELU (alpha = 1.0): expm1 on the clamped negative branch avoids exp overflow
    # in the unselected lane and keeps precision near zero.
    h = jnp.where(h > 0, h, jnp.expm1(jnp.minimum(h, 0.0)))
    return h @ params["w2_t"] + params["b2"]  # (1, num_models)


# ---------------------------------------------------------------------------
# Pallas kernel: weighted sum of the stacked model outputs (the hot path).
# Grid iterates over (row-tiles, vocab-tiles); per-model weights live in SMEM.
# ---------------------------------------------------------------------------
def weighted_sum_kernel(w_ref, outs_ref, o_ref):
    # w:    (N,)  in SMEM  -- per-model scalar weights (f32)
    # outs: (N, TR, VT)    -- tile of all model outputs (VMEM)
    # o:    (TR, VT)       -- ensemble output tile (VMEM)
    n = outs_ref.shape[0]
    acc = outs_ref[0].astype(jnp.float32) * w_ref[0]
    for i in range(1, n):  # small static unroll over models -> simple FMAs
        acc = acc + outs_ref[i].astype(jnp.float32) * w_ref[i]
    o_ref[...] = acc.astype(o_ref.dtype)


def _choose_tiles(num_models, rows, vocab, in_itemsize, out_itemsize,
                  vmem_budget_bytes, sublane, max_tile_rows=2048,
                  min_grid_points=1):
    """Pick (tile_rows, vocab_tile) so the double-buffered working set fits VMEM."""
    # Lane-dense vocab tile (multiple of 128); prefer covering the vocab in one
    # tile, shrinking first if even a minimal row block would blow the budget.
    vt = _round_up(vocab, 128)

    def per_row_bytes(v):
        # double-buffered input block (N model rows at input itemsize)
        # + double-buffered output block (1 row at output itemsize)
        return 2 * (num_models * in_itemsize + out_itemsize) * v

    while per_row_bytes(vt) * sublane > vmem_budget_bytes and vt > 128:
        vt = max(128, _round_up(vt // 2, 128))

    # Row tile (multiple of the dtype-packed sublane) as large as budget allows.
    tr = max(sublane, (vmem_budget_bytes // per_row_bytes(vt)) // sublane * sublane)
    tr = min(tr, max_tile_rows)
    tr = min(tr, _round_up(rows, sublane))

    # Megacore: only force >= min_grid_points total grid points when the grid
    # would otherwise be a single block and there is enough row work to split.
    grid_points = pl.cdiv(rows, tr) * pl.cdiv(vocab, vt)
    if grid_points < min_grid_points and rows > sublane:
        tr = max(sublane,
                 _round_up(pl.cdiv(_round_up(rows, sublane), min_grid_points), sublane))
    return int(tr), int(vt)


def weighted_ensemble_combine(weights, stacked_outputs, *, out_dtype=None,
                              vmem_budget_bytes=None, vmem_limit_bytes=None):
    """weights: (num_models,) f32.  stacked_outputs: (num_models, rows, vocab)."""
    n, rows, vocab = stacked_outputs.shape
    out_dtype = stacked_outputs.dtype if out_dtype is None else jnp.dtype(out_dtype)
    in_itemsize = jnp.dtype(stacked_outputs.dtype).itemsize
    out_itemsize = jnp.dtype(out_dtype).itemsize
    weights = weights.astype(jnp.float32).reshape(n)

    # Generation-aware VMEM budgeting: v7x (64 MiB) -> ~32 MiB budget / 48 MiB
    # limit; v5e/v6e (128 MiB) -> ~64 / 96 MiB; unknown -> conservative v7x split.
    cap = _vmem_capacity_bytes()
    if vmem_limit_bytes is None:
        vmem_limit_bytes = min(cap * 3 // 4, 96 * 1024 * 1024)
    if vmem_budget_bytes is None:
        vmem_budget_bytes = min(cap // 2, 64 * 1024 * 1024)
    vmem_budget_bytes = min(vmem_budget_bytes, vmem_limit_bytes)

    # dtype-packed sublane multiple: 8 (f32), 16 (bf16), 32 (int8/fp8).
    sublane = max(32 // in_itemsize, 32 // out_itemsize, 8)
    # Only force a 2-way split on multi-TensorCore chips (v7x); pure overhead on 1-TC.
    min_grid_points = 2 if _num_tensorcores() >= 2 else 1

    tile_rows, vocab_tile = _choose_tiles(
        n, rows, vocab, in_itemsize, out_itemsize, vmem_budget_bytes, sublane,
        min_grid_points=min_grid_points)

    # No wrapper-side padding/cropping: pl.cdiv grid + partial boundary blocks.
    # OOB input garbage only feeds FMAs whose output lanes are masked on store.
    grid = (pl.cdiv(rows, tile_rows), pl.cdiv(vocab, vocab_tile))

    return pl.pallas_call(
        weighted_sum_kernel,
        out_shape=jax.ShapeDtypeStruct((rows, vocab), out_dtype),
        grid_spec=pltpu.PrefetchScalarGridSpec(
            num_scalar_prefetch=0,
            grid=grid,
            in_specs=[
                # Tiny per-model weight vector lives in SMEM; read as scalars.
                pl.BlockSpec(memory_space=pltpu.MemorySpace.SMEM),
                # All model outputs for this (row, vocab) tile.
                # (pl.Buffered(3) intentionally not set; see header comment.)
                pl.BlockSpec((n, tile_rows, vocab_tile), lambda i, j: (0, i, j)),
            ],
            out_specs=pl.BlockSpec((tile_rows, vocab_tile), lambda i, j: (i, j)),
        ),
        compiler_params=pltpu.CompilerParams(
            dimension_semantics=("parallel", "parallel"),
            vmem_limit_bytes=int(vmem_limit_bytes),
        ),
    )(weights, stacked_outputs)


# ---------------------------------------------------------------------------
# Full WeightedEnsemble forward.
# ---------------------------------------------------------------------------
@jax.jit
def weighted_ensemble_forward(model_outputs, params):
    """model_outputs: (num_models, batch, seq, vocab) -- stacked sub-model outputs."""
    num_models, batch, seq, vocab = model_outputs.shape
    weights_2d = meta_classifier_weights(params, num_models)        # (1, num_models)
    stacked = model_outputs.reshape(num_models, batch * seq, vocab)
    hyp = weighted_ensemble_combine(weights_2d[0], stacked)
    return hyp.reshape(batch, seq, vocab), weights_2d


def init_params(key, num_models, dim):
    """Deterministic init mimicking nn.Linear (uniform +-1/sqrt(fan_in))."""
    k1, k2, k3, k4 = jax.random.split(key, 4)
    bound1 = 1.0 / jnp.sqrt(num_models)
    bound2 = 1.0 / jnp.sqrt(dim)
    # Stored transposed so the forward does x @ W_t (PyTorch: x @ W.T).
    w1_t = jax.random.uniform(k1, (num_models, dim), jnp.float32, -bound1, bound1)
    b1 = jax.random.uniform(k2, (1, dim), jnp.float32, -bound1, bound1)
    w2_t = jax.random.uniform(k3, (dim, num_models), jnp.float32, -bound2, bound2)
    b2 = jax.random.uniform(k4, (1, num_models), jnp.float32, -bound2, bound2)
    return {"w1_t": w1_t, "b1": b1, "w2_t": w2_t, "b2": b2}


# ---------------------------------------------------------------------------
# Reference (pure JAX) for correctness checking.
# ---------------------------------------------------------------------------
def reference_forward(model_outputs, params):
    num_models = model_outputs.shape[0]
    ones = jnp.ones((1, num_models), dtype=jnp.float32)
    h = ones @ params["w1_t"] + params["b1"]
    h = jax.nn.elu(h)
    w = (h @ params["w2_t"] + params["b2"])[0]  # (num_models,)
    return jnp.einsum("n,nbtv->btv", w, model_outputs.astype(jnp.float32))


if __name__ == "__main__":
    num_models = 4
    dim = 128          # meta_classifier hidden dim (module default)

    key = jax.random.PRNGKey(0)
    kp, ko1, ko2 = jax.random.split(key, 3)
    params = init_params(kp, num_models, dim)

    # Case 1: aligned shapes (batch=2, seq=8, vocab=128).
    batch, seq, vocab = 2, 8, 128
    model_outputs = jax.random.normal(ko1, (num_models, batch, seq, vocab), jnp.float32)
    hyp, weights = weighted_ensemble_forward(model_outputs, params)
    hyp = jax.block_until_ready(hyp)
    ref = reference_forward(model_outputs, params)
    assert hyp.shape == (batch, seq, vocab)
    assert jnp.allclose(hyp, ref, atol=1e-4, rtol=1e-4), "mismatch vs reference (aligned)"

    # Case 2: ragged shapes exercising the padding-free partial-block path.
    batch2, seq2, vocab2 = 2, 7, 200
    model_outputs2 = jax.random.normal(ko2, (num_models, batch2, seq2, vocab2), jnp.float32)
    hyp2, _ = weighted_ensemble_forward(model_outputs2, params)
    hyp2 = jax.block_until_ready(hyp2)
    ref2 = reference_forward(model_outputs2, params)
    assert hyp2.shape == (batch2, seq2, vocab2)
    assert jnp.allclose(hyp2, ref2, atol=1e-4, rtol=1e-4), "mismatch vs reference (ragged)"

    print("KERNEL_OK")
</pallas_src>

<mosaic_0001>
module attributes {stable_mosaic.version = 11 : i64} {
  func.func @weighted_sum_kernel(%arg0: i32, %arg1: i32, %arg2: memref<4xf32, #tpu.memory_space<smem>>, %arg3: memref<4x16x128xf32, #tpu.memory_space<vmem>>, %arg4: memref<16x128xf32, #tpu.memory_space<vmem>>) attributes {dimension_semantics = [#tpu.dimension_semantics<parallel>, #tpu.dimension_semantics<parallel>], iteration_bounds = array<i64: 1, 1>, scalar_prefetch = 0 : i64, scratch_operands = 0 : i64, tpu.core_type = #tpu.core_type<tc>, window_params = [{transform_indices = @transform_0, window_bounds = array<i64: 4>}, {transform_indices = @transform_1, window_bounds = array<i64: 4, 16, 128>}, {transform_indices = @transform_2, window_bounds = array<i64: 16, 128>}]} {
    %c0 = arith.constant 0 : index
    %c0_0 = arith.constant 0 : index
    %c0_1 = arith.constant 0 : index
    %0 = vector.load %arg3[%c0, %c0_0, %c0_1] : memref<4x16x128xf32, #tpu.memory_space<vmem>>, vector<1x16x128xf32>
    %1 = vector.shape_cast %0 : vector<1x16x128xf32> to vector<16x128xf32>
    %c0_2 = arith.constant 0 : index
    %2 = memref.load %arg2[%c0_2] : memref<4xf32, #tpu.memory_space<smem>>
    %3 = vector.broadcast %2 : f32 to vector<16x128xf32>
    %4 = arith.mulf %1, %3 : vector<16x128xf32>
    %c1 = arith.constant 1 : index
    %c0_3 = arith.constant 0 : index
    %c0_4 = arith.constant 0 : index
    %5 = vector.load %arg3[%c1, %c0_3, %c0_4] : memref<4x16x128xf32, #tpu.memory_space<vmem>>, vector<1x16x128xf32>
    %6 = vector.shape_cast %5 : vector<1x16x128xf32> to vector<16x128xf32>
    %c1_5 = arith.constant 1 : index
    %7 = memref.load %arg2[%c1_5] : memref<4xf32, #tpu.memory_space<smem>>
    %8 = vector.broadcast %7 : f32 to vector<16x128xf32>
    %9 = arith.mulf %6, %8 : vector<16x128xf32>
    %10 = arith.addf %4, %9 : vector<16x128xf32>
    %c2 = arith.constant 2 : index
    %c0_6 = arith.constant 0 : index
    %c0_7 = arith.constant 0 : index
    %11 = vector.load %arg3[%c2, %c0_6, %c0_7] : memref<4x16x128xf32, #tpu.memory_space<vmem>>, vector<1x16x128xf32>
    %12 = vector.shape_cast %11 : vector<1x16x128xf32> to vector<16x128xf32>
    %c2_8 = arith.constant 2 : index
    %13 = memref.load %arg2[%c2_8] : memref<4xf32, #tpu.memory_space<smem>>
    %14 = vector.broadcast %13 : f32 to vector<16x128xf32>
    %15 = arith.mulf %12, %14 : vector<16x128xf32>
    %16 = arith.addf %10, %15 : vector<16x128xf32>
    %c3 = arith.constant 3 : index
    %c0_9 = arith.constant 0 : index
    %c0_10 = arith.constant 0 : index
    %17 = vector.load %arg3[%c3, %c0_9, %c0_10] : memref<4x16x128xf32, #tpu.memory_space<vmem>>, vector<1x16x128xf32>
    %18 = vector.shape_cast %17 : vector<1x16x128xf32> to vector<16x128xf32>
    %c3_11 = arith.constant 3 : index
    %19 = memref.load %arg2[%c3_11] : memref<4xf32, #tpu.memory_space<smem>>
    %20 = vector.broadcast %19 : f32 to vector<16x128xf32>
    %21 = arith.mulf %18, %20 : vector<16x128xf32>
    %22 = arith.addf %16, %21 : vector<16x128xf32>
    %c0_12 = arith.constant 0 : index
    %c0_13 = arith.constant 0 : index
    %23 = vector.load %arg4[%c0_12, %c0_13] : memref<16x128xf32, #tpu.memory_space<vmem>>, vector<16x128xf32>
    tpu.vector_store %arg4[%c0_12, %c0_13], %22 {strides = array<i32>} : memref<16x128xf32, #tpu.memory_space<vmem>>, vector<16x128xf32>,
    return
  }
  func.func @transform_0(%arg0: i32, %arg1: i32) -> i32 {
    %c0_i32 = arith.constant 0 : i32
    %c0_i32_0 = arith.constant 0 : i32
    return %c0_i32 : i32
  }
  func.func @transform_1(%arg0: i32, %arg1: i32) -> (i32, i32, i32) {
    %c0_i32 = arith.constant 0 : i32
    %c0_i32_0 = arith.constant 0 : i32
    return %c0_i32, %arg0, %arg1 : i32, i32, i32
  }
  func.func @transform_2(%arg0: i32, %arg1: i32) -> (i32, i32) {
    %c0_i32 = arith.constant 0 : i32
    return %arg0, %arg1 : i32, i32
  }
}

</mosaic_0001>

<llo_original>
// kernel: weighted_ensemble_forward.1
$region0: #{weighted_ensemble_forward.1}
  #allocation0 [shape = 'u32[]', space=smem, size = 0x4, offset = 0x4, fixed_abs, tag = 'smem constant byte address 0x4 - core index']
  #allocation1 [shape = 'u32[144,128]{1,0:T(1,128)}', space=vmem, size = 0x12000, scoped, tag = 'internal scratch']
  %s0 = inlined_call_operand.vmem [shape: f32[4], index: 0, kind: input, shape index: {}]
  %s1 = inlined_call_operand.hbm [shape: f32[4,16,128], index: 1, kind: input, shape index: {}]
  %s2 = inlined_call_operand.hbm [shape: f32[16,128], index: 2, kind: output, shape index: {}]
  %s3 = sld [smem:[#allocation0]]
  $region26: #{weighted_ensemble_forward.1} parent=0
    _
  %s5 = ssub.s32 1, %s3
  %s6 = scalar_select 0, %s5, %s3
  $region1: #{weighted_ensemble_forward.1} parent=0
    #allocation2 [shape = 'u8[512]{0}', space=smem, size = 0x200, scoped, tag = 'input window, operand 0, single buffered']
    #allocation3 [shape = 's32[1]{0}', space=sflag, size = 0x4, scoped, tag = 'scoped memory for weighted_ensemble_forward.1']
    #allocation4 [shape = 's32[1]{0}', space=sflag, size = 0x4, scoped, tag = 'scoped memory for weighted_ensemble_forward.1']
    #allocation5 [shape = 's32[1]{0}', space=sflag, size = 0x4, scoped, tag = 'scoped memory for weighted_ensemble_forward.1']
    #allocation6 [shape = 'u8[32768]{0}', space=vmem, size = 0x8000, scoped, tag = 'input window, operand 1, single buffered']
    #allocation7 [shape = 'u8[8192]{0}', space=vmem, size = 0x2000, scoped, tag = 'output window, operand 0, single buffered']
    %7 = vsyncpa [#allocation5], 0
    %8 = vsyncpa [#allocation3], 0
    %9 = vsyncpa [#allocation4], 0
    // Predicated region
    $region2: #{weighted_ensemble_forward.1} parent=1 // pred_check
      _
    $region3: #{weighted_ensemble_forward.1} parent=1 // pred_check_branch
      %11 = sbr.rel (0) target = $region5
    $region4: #{weighted_ensemble_forward.1} parent=1 // pred_region
      %s13 = ssub.s32 16, 16
      %14 = vsyncadd [#allocation5], %s13
      %s16 = sshll.u32 %s0, 4
      %s17 = int_to_ptr.vmem [resolvable:$true] %s16
      %19 = dma.vmem_to_smem %s17, 16, [#allocation2], [#allocation5]
    $region5: #{weighted_ensemble_forward.1} parent=1 // pred_fallthru
      _
    // Predicated region
    $region6: #{weighted_ensemble_forward.1} parent=1 // pred_check
      _
    $region7: #{weighted_ensemble_forward.1} parent=1 // pred_check_branch
      %21 = sbr.rel (0) target = $region9
    $region8: #{weighted_ensemble_forward.1} parent=1 // pred_region
      %s23 = ssub.s32 1024, 1024
      %24 = vsyncadd [#allocation3], %s23
      %s25 = sshll.u32 [#allocation6], 4
      %s26 = int_to_ptr.vmem [resolvable:$true] %s25
      %31 = dma.hbm_to_vmem [thread:$0]  %s1, 1024, %s26, [#allocation3], 128, 128, 8
    $region9: #{weighted_ensemble_forward.1} parent=1 // pred_fallthru
      _
    // Predicated region
    $region10: #{weighted_ensemble_forward.1} parent=1 // pred_check
      _
    $region11: #{weighted_ensemble_forward.1} parent=1 // pred_check_branch
      %33 = sbr.rel (0) target = $region13
    $region12: #{weighted_ensemble_forward.1} parent=1 // pred_region
      %34 = dma.done [#allocation5], 16
    $region13: #{weighted_ensemble_forward.1} parent=1 // pred_fallthru
      _
    // Predicated region
    $region14: #{weighted_ensemble_forward.1} parent=1 // pred_check
      _
    $region15: #{weighted_ensemble_forward.1} parent=1 // pred_check_branch
      %36 = sbr.rel (0) target = $region17
    $region16: #{weighted_ensemble_forward.1} parent=1 // pred_region
      %37 = dma.done [#allocation3], 1024
    $region17: #{weighted_ensemble_forward.1} parent=1 // pred_fallthru
      _
    %38 = sfence
    %v39 = vld [vmem:[#allocation6] sm:$0xff]
    %v40 = vld [vmem:[#allocation6 + $0x8] sm:$0xff]
    %s41 = sld [smem:[#allocation2]]
    %v42 = vstv %s41
    %v43 = vmul.f32 %v39, %v42
    %v44 = vmul.f32 %v40, %v42
    %s45 = scalar_lea.vmem [#allocation6], 16
    %v46 = vld [vmem:[%s45] sm:$0xff]
    %v47 = vld [vmem:[%s45 + $0x8] sm:$0xff]
    %s48 = sld [smem:[#allocation2 + $0x1]]
    %v49 = vstv %s48
    %v50 = vmul.f32 %v46, %v49
    %v51 = vmul.f32 %v47, %v49
    %v52 = vadd.f32 %v43, %v50
    %v53 = vadd.f32 %v44, %v51
    %s54 = scalar_lea.vmem [#allocation6], 32
    %v55 = vld [vmem:[%s54] sm:$0xff]
    %v56 = vld [vmem:[%s54 + $0x8] sm:$0xff]
    %s57 = sld [smem:[#allocation2 + $0x2]]
    %v58 = vstv %s57
    %v59 = vmul.f32 %v55, %v58
    %v60 = vmul.f32 %v56, %v58
    %v61 = vadd.f32 %v52, %v59
    %v62 = vadd.f32 %v53, %v60
    %s63 = scalar_lea.vmem [#allocation6], 48
    %v64 = vld [vmem:[%s63] sm:$0xff]
    %v65 = vld [vmem:[%s63 + $0x8] sm:$0xff]
    %s66 = sld [smem:[#allocation2 + $0x3]]
    %v67 = vstv %s66
    %v68 = vmul.f32 %v64, %v67
    %v69 = vmul.f32 %v65, %v67
    %v70 = vadd.f32 %v61, %v68
    %v71 = vadd.f32 %v62, %v69
    %72 = vst [vmem:[#allocation7] sm:$0xff] %v70
    %73 = vst [vmem:[#allocation7 + $0x8] sm:$0xff] %v71
    // Predicated region
    $region18: #{weighted_ensemble_forward.1} parent=1 // pred_check
      _
    $region19: #{weighted_ensemble_forward.1} parent=1 // pred_check_branch
      %75 = sbr.rel (0) target = $region21
    $region20: #{weighted_ensemble_forward.1} parent=1 // pred_region
      %s77 = ssub.s32 256, 256
      %78 = vsyncadd [#allocation4], %s77
      %s79 = sshll.u32 [#allocation7], 4
      %s80 = int_to_ptr.vmem [resolvable:$true] %s79
      %85 = dma.vmem_to_hbm [thread:$0]  %s80, 256, %s2, [#allocation4], 128, 128, 8
    $region21: #{weighted_ensemble_forward.1} parent=1 // pred_fallthru
      _
    // Predicated region
    $region22: #{weighted_ensemble_forward.1} parent=1 // pred_check
      _
    $region23: #{weighted_ensemble_forward.1} parent=1 // pred_check_branch
      %87 = sbr.rel (0) target = $region25
    $region24: #{weighted_ensemble_forward.1} parent=1 // pred_region
      %88 = dma.done [#allocation4], 256
    $region25: #{weighted_ensemble_forward.1} parent=1 // pred_fallthru
      _
    %89 = vsyncpa [#allocation3], 1
    %90 = vsyncpa [#allocation4], 1
    %91 = vsyncpa [#allocation5], 1

</llo_original>
